<compile_context>
chip_gen: v6e
topology: v6e:2x2x1
jax: 0.10.0
libtpu: 0.0.40
codegen_flags: <defaults>
</compile_context>

<pallas_src>
import math
import jax
import jax.numpy as jnp
import numpy as np
from jax.experimental import pallas as pl
from jax.experimental.pallas import tpu as pltpu


def _extraction_kernel(x_ref, wqkv_ref, wo_ref, w1a_ref, w1b_ref, b1_ref,
                       w2t_ref, b2_ref, o_ref):
    Bt, N, H = x_ref.shape
    x3 = x_ref[...].astype(jnp.float32)                 # (Bt, N, H)
    x = x3.reshape(Bt * N, H)                           # (Bt*N, H) slab for dense matmuls

    # --- fused QKV projection (scale already folded into the Wq columns) -----
    qkv = jnp.dot(x, wqkv_ref[...], preferred_element_type=jnp.float32)   # (Bt*N, 3H)
    q = qkv[:, 0 * H:1 * H].reshape(Bt, N, H)
    k = qkv[:, 1 * H:2 * H].reshape(Bt, N, H)
    v = qkv[:, 2 * H:3 * H].reshape(Bt, N, H)

    # --- per-batch attention (scores must stay block-diagonal per batch) -----
    s = jnp.einsum('bqd,bkd->bqk', q, k, preferred_element_type=jnp.float32)  # (Bt, N, N)
    s = s - jnp.max(s, axis=-1, keepdims=True)
    p = jnp.exp(s)
    p = p * pl.reciprocal(jnp.sum(p, axis=-1, keepdims=True), approx=False)

    heads = jnp.einsum('bqk,bkd->bqd', p, v, preferred_element_type=jnp.float32)  # (Bt, N, H)
    attn_out = jnp.dot(heads.reshape(Bt * N, H), wo_ref[...],
                       preferred_element_type=jnp.float32)                # (Bt*N, H)

    # --- MLP: concat replaced by split weight halves --------------------------
    h1 = (jnp.dot(x, w1a_ref[...], preferred_element_type=jnp.float32)
          + jnp.dot(attn_out, w1b_ref[...], preferred_element_type=jnp.float32)
          + b1_ref[...])
    h1 = jnp.maximum(h1, 0.0)                                             # ReLU
    out = jnp.dot(h1, w2t_ref[...], preferred_element_type=jnp.float32) + b2_ref[...]

    o_ref[...] = out.reshape(Bt, N, H).astype(o_ref.dtype)


def _choose_bt(B, N, target_rows):
    """Largest divisor of B such that Bt*N <= target_rows (>=1)."""
    target_bt = max(1, target_rows // max(N, 1))
    bt = 1
    for d in range(1, min(B, target_bt) + 1):
        if B % d == 0:
            bt = d
    return bt


def extraction_module(x, params, *, target_rows=256):
    """x: (B, N, H) float32. params: dict of weights (see init_params)."""
    B, N, H = x.shape
    scale = 1.0 / math.sqrt(H)

    # One-time weight prep (glue, outside the kernel):
    #  - fold softmax scale into Wq, fuse Q|K|V into one (H, 3H) weight,
    #  - split/transpose the nn.Linear weights so the kernel does plain x @ W.
    wqkv = jnp.concatenate(
        [params["wq"] * scale, params["wk"], params["wv"]], axis=1)  # (H, 3H)
    wo = params["wo"]                                                # (H, H)
    w1a = params["w1"][:, :H].T                                      # (H, H)  acts on x
    w1b = params["w1"][:, H:].T                                      # (H, H)  acts on attn_out
    b1 = params["b1"].reshape(1, H)
    w2t = params["w2"].T                                             # (H, H)
    b2 = params["b2"].reshape(1, H)

    Bt = _choose_bt(B, N, target_rows)   # rows per grid step = Bt*N (aim ~256)
    grid = (B // Bt,)

    def full(shape):
        return pl.BlockSpec(shape, lambda b: tuple(0 for _ in shape))

    return pl.pallas_call(
        _extraction_kernel,
        out_shape=jax.ShapeDtypeStruct((B, N, H), x.dtype),
        grid_spec=pltpu.PrefetchScalarGridSpec(
            num_scalar_prefetch=0,
            grid=grid,
            in_specs=[
                pl.BlockSpec((Bt, N, H), lambda b: (b, 0, 0)),   # x
                full((H, 3 * H)),                                # Wqkv (scale folded in)
                full((H, H)),                                    # Wout
                full((H, H)),                                    # W1a (x half)
                full((H, H)),                                    # W1b (attn half)
                full((1, H)),                                    # b1
                full((H, H)),                                    # W2^T
                full((1, H)),                                    # b2
            ],
            out_specs=pl.BlockSpec((Bt, N, H), lambda b: (b, 0, 0)),
        ),
        compiler_params=pltpu.CompilerParams(
            dimension_semantics=("parallel",)),
    )(x, wqkv, wo, w1a, w1b, b1, w2t, b2)


def init_params(key, H):
    ks = jax.random.split(key, 8)
    # Kool-style MHA params: uniform(-1/sqrt(d), 1/sqrt(d)); Linear: same convention.
    u = lambda k, shape, fan: jax.random.uniform(
        k, shape, jnp.float32, -1.0 / math.sqrt(fan), 1.0 / math.sqrt(fan))
    return {
        "wq": u(ks[0], (H, H), H),
        "wk": u(ks[1], (H, H), H),
        "wv": u(ks[2], (H, H), H),
        "wo": u(ks[3], (H, H), H),
        "w1": u(ks[4], (H, 2 * H), 2 * H),   # nn.Linear(2H, H).weight  (out, in)
        "b1": u(ks[5], (H,), 2 * H),
        "w2": u(ks[6], (H, H), H),           # nn.Linear(H, H).weight
        "b2": u(ks[7], (H,), H),
    }


def _reference(x, p):
    """Plain-JAX reference mirroring the PyTorch forward."""
    H = x.shape[-1]
    q = x @ p["wq"]; k = x @ p["wk"]; v = x @ p["wv"]
    s = (q @ jnp.swapaxes(k, -1, -2)) / math.sqrt(H)
    a = jax.nn.softmax(s, axis=-1)
    attn_out = (a @ v) @ p["wo"]
    cat = jnp.concatenate([x, attn_out], axis=-1)
    h1 = jax.nn.relu(cat @ p["w1"].T + p["b1"])
    return h1 @ p["w2"].T + p["b2"]


if __name__ == "__main__":
    B, N, H = 2, 8, 128   # batch=2, n_agents=8, hidden_dim=128 (module default)
    key = jax.random.PRNGKey(0)
    kx, kp = jax.random.split(key)
    x = jax.random.normal(kx, (B, N, H), jnp.float32)
    params = init_params(kp, H)

    out = extraction_module(x, params)
    out = jax.block_until_ready(out)

    ref = _reference(x, params)
    np.testing.assert_allclose(np.asarray(out), np.asarray(ref), rtol=2e-5, atol=2e-5)

    print("KERNEL_OK")
</pallas_src>

<mosaic_0001>
module attributes {stable_mosaic.version = 11 : i64} {
  func.func @_extraction_kernel(%arg0: i32, %arg1: memref<2x8x128xf32, #tpu.memory_space<vmem>>, %arg2: memref<128x384xf32, #tpu.memory_space<vmem>>, %arg3: memref<128x128xf32, #tpu.memory_space<vmem>>, %arg4: memref<128x128xf32, #tpu.memory_space<vmem>>, %arg5: memref<128x128xf32, #tpu.memory_space<vmem>>, %arg6: memref<1x128xf32, #tpu.memory_space<vmem>>, %arg7: memref<128x128xf32, #tpu.memory_space<vmem>>, %arg8: memref<1x128xf32, #tpu.memory_space<vmem>>, %arg9: memref<2x8x128xf32, #tpu.memory_space<vmem>>) attributes {dimension_semantics = [#tpu.dimension_semantics<parallel>], iteration_bounds = array<i64: 1>, scalar_prefetch = 0 : i64, scratch_operands = 0 : i64, tpu.core_type = #tpu.core_type<tc>, window_params = [{transform_indices = @transform_0, window_bounds = array<i64: 2, 8, 128>}, {pipeline_mode = #tpu.pipeline_mode<synchronous>, transform_indices = @transform_1, window_bounds = array<i64: 128, 384>}, {pipeline_mode = #tpu.pipeline_mode<synchronous>, transform_indices = @transform_2, window_bounds = array<i64: 128, 128>}, {pipeline_mode = #tpu.pipeline_mode<synchronous>, transform_indices = @transform_3, window_bounds = array<i64: 128, 128>}, {pipeline_mode = #tpu.pipeline_mode<synchronous>, transform_indices = @transform_4, window_bounds = array<i64: 128, 128>}, {pipeline_mode = #tpu.pipeline_mode<synchronous>, transform_indices = @transform_5, window_bounds = array<i64: 1, 128>}, {pipeline_mode = #tpu.pipeline_mode<synchronous>, transform_indices = @transform_6, window_bounds = array<i64: 128, 128>}, {pipeline_mode = #tpu.pipeline_mode<synchronous>, transform_indices = @transform_7, window_bounds = array<i64: 1, 128>}, {transform_indices = @transform_8, window_bounds = array<i64: 2, 8, 128>}]} {
    %c0 = arith.constant 0 : index
    %c0_0 = arith.constant 0 : index
    %c0_1 = arith.constant 0 : index
    %0 = vector.load %arg1[%c0, %c0_0, %c0_1] : memref<2x8x128xf32, #tpu.memory_space<vmem>>, vector<2x8x128xf32>
    %1 = vector.shape_cast %0 : vector<2x8x128xf32> to vector<16x128xf32>
    %c0_2 = arith.constant 0 : index
    %c0_3 = arith.constant 0 : index
    %2 = vector.load %arg2[%c0_2, %c0_3] : memref<128x384xf32, #tpu.memory_space<vmem>>, vector<128x384xf32>
    %cst = arith.constant dense<0.000000e+00> : vector<16x384xf32>
    %3 = tpu.matmul %1, %2, %cst {dimension_numbers = #tpu.dot_dimension_numbers<[1], [0], [0], [1], [0, 0, 1, 1], [], []>} : vector<16x128xf32>, vector<128x384xf32>, vector<16x384xf32> -> vector<16x384xf32>
    %4 = vector.extract_strided_slice %3 {offsets = [0, 0], sizes = [16, 128], strides = [1, 1]} : vector<16x384xf32> to vector<16x128xf32>
    %5 = vector.shape_cast %4 : vector<16x128xf32> to vector<2x8x128xf32>
    %6 = vector.extract_strided_slice %3 {offsets = [0, 128], sizes = [16, 128], strides = [1, 1]} : vector<16x384xf32> to vector<16x128xf32>
    %7 = vector.shape_cast %6 : vector<16x128xf32> to vector<2x8x128xf32>
    %8 = vector.extract_strided_slice %3 {offsets = [0, 256], sizes = [16, 128], strides = [1, 1]} : vector<16x384xf32> to vector<16x128xf32>
    %9 = vector.shape_cast %8 : vector<16x128xf32> to vector<2x8x128xf32>
    "tpu.trace_start"() <{level = 10 : i32, message = "bqd,bkd->bqk"}> : () -> ()
    %cst_4 = arith.constant dense<0.000000e+00> : vector<2x8x8xf32>
    %10 = tpu.matmul %5, %7, %cst_4 {dimension_numbers = #tpu.dot_dimension_numbers<[2], [2], [1], [1], [0, 0, 0, 1, 1, 1], [0], [0]>} : vector<2x8x128xf32>, vector<2x8x128xf32>, vector<2x8x8xf32> -> vector<2x8x8xf32>
    "tpu.trace_stop"() : () -> ()
    %cst_5 = arith.constant dense<0xFF800000> : vector<2x8xf32>
    %11 = vector.multi_reduction <maximumf>, %10, %cst_5 [2] : vector<2x8x8xf32> to vector<2x8xf32>
    %12 = vector.shape_cast %11 : vector<2x8xf32> to vector<2x8x1xf32>
    %13 = vector.broadcast %12 : vector<2x8x1xf32> to vector<2x8x8xf32>
    %14 = arith.subf %10, %13 : vector<2x8x8xf32>
    %15 = math.exp %14 : vector<2x8x8xf32>
    %cst_6 = arith.constant dense<0.000000e+00> : vector<2x8xf32>
    %16 = vector.multi_reduction <add>, %15, %cst_6 [2] : vector<2x8x8xf32> to vector<2x8xf32>
    %17 = vector.shape_cast %16 : vector<2x8xf32> to vector<2x8x1xf32>
    %18 = tpu.reciprocal %17 : vector<2x8x1xf32> -> vector<2x8x1xf32>
    %19 = vector.broadcast %18 : vector<2x8x1xf32> to vector<2x8x8xf32>
    %20 = arith.mulf %15, %19 : vector<2x8x8xf32>
    "tpu.trace_start"() <{level = 10 : i32, message = "bqk,bkd->bqd"}> : () -> ()
    %cst_7 = arith.constant dense<0.000000e+00> : vector<2x8x128xf32>
    %21 = tpu.matmul %20, %9, %cst_7 {dimension_numbers = #tpu.dot_dimension_numbers<[2], [1], [1], [2], [0, 0, 0, 1, 1, 2], [0], [0]>} : vector<2x8x8xf32>, vector<2x8x128xf32>, vector<2x8x128xf32> -> vector<2x8x128xf32>
    "tpu.trace_stop"() : () -> ()
    %22 = vector.shape_cast %21 : vector<2x8x128xf32> to vector<16x128xf32>
    %c0_8 = arith.constant 0 : index
    %c0_9 = arith.constant 0 : index
    %23 = vector.load %arg3[%c0_8, %c0_9] : memref<128x128xf32, #tpu.memory_space<vmem>>, vector<128x128xf32>
    %cst_10 = arith.constant dense<0.000000e+00> : vector<16x128xf32>
    %24 = tpu.matmul %22, %23, %cst_10 {dimension_numbers = #tpu.dot_dimension_numbers<[1], [0], [0], [1], [0, 0, 1, 1], [], []>} : vector<16x128xf32>, vector<128x128xf32>, vector<16x128xf32> -> vector<16x128xf32>
    %c0_11 = arith.constant 0 : index
    %c0_12 = arith.constant 0 : index
    %25 = vector.load %arg4[%c0_11, %c0_12] : memref<128x128xf32, #tpu.memory_space<vmem>>, vector<128x128xf32>
    %cst_13 = arith.constant dense<0.000000e+00> : vector<16x128xf32>
    %26 = tpu.matmul %1, %25, %cst_13 {dimension_numbers = #tpu.dot_dimension_numbers<[1], [0], [0], [1], [0, 0, 1, 1], [], []>} : vector<16x128xf32>, vector<128x128xf32>, vector<16x128xf32> -> vector<16x128xf32>
    %c0_14 = arith.constant 0 : index
    %c0_15 = arith.constant 0 : index
    %27 = vector.load %arg5[%c0_14, %c0_15] : memref<128x128xf32, #tpu.memory_space<vmem>>, vector<128x128xf32>
    %cst_16 = arith.constant dense<0.000000e+00> : vector<16x128xf32>
    %28 = tpu.matmul %24, %27, %cst_16 {dimension_numbers = #tpu.dot_dimension_numbers<[1], [0], [0], [1], [0, 0, 1, 1], [], []>} : vector<16x128xf32>, vector<128x128xf32>, vector<16x128xf32> -> vector<16x128xf32>
    %29 = arith.addf %26, %28 : vector<16x128xf32>
    %c0_17 = arith.constant 0 : index
    %c0_18 = arith.constant 0 : index
    %30 = vector.load %arg6[%c0_17, %c0_18] : memref<1x128xf32, #tpu.memory_space<vmem>>, vector<1x128xf32>
    %31 = vector.broadcast %30 : vector<1x128xf32> to vector<16x128xf32>
    %32 = arith.addf %29, %31 : vector<16x128xf32>
    %cst_19 = arith.constant 0.000000e+00 : f32
    %33 = vector.broadcast %cst_19 : f32 to vector<16x128xf32>
    %34 = arith.maximumf %32, %33 : vector<16x128xf32>
    %c0_20 = arith.constant 0 : index
    %c0_21 = arith.constant 0 : index
    %35 = vector.load %arg7[%c0_20, %c0_21] : memref<128x128xf32, #tpu.memory_space<vmem>>, vector<128x128xf32>
    %cst_22 = arith.constant dense<0.000000e+00> : vector<16x128xf32>
    %36 = tpu.matmul %34, %35, %cst_22 {dimension_numbers = #tpu.dot_dimension_numbers<[1], [0], [0], [1], [0, 0, 1, 1], [], []>} : vector<16x128xf32>, vector<128x128xf32>, vector<16x128xf32> -> vector<16x128xf32>
    %c0_23 = arith.constant 0 : index
    %c0_24 = arith.constant 0 : index
    %37 = vector.load %arg8[%c0_23, %c0_24] : memref<1x128xf32, #tpu.memory_space<vmem>>, vector<1x128xf32>
    %38 = vector.broadcast %37 : vector<1x128xf32> to vector<16x128xf32>
    %39 = arith.addf %36, %38 : vector<16x128xf32>
    %40 = vector.shape_cast %39 : vector<16x128xf32> to vector<2x8x128xf32>
    %c0_25 = arith.constant 0 : index
    %c0_26 = arith.constant 0 : index
    %c0_27 = arith.constant 0 : index
    %41 = vector.load %arg9[%c0_25, %c0_26, %c0_27] : memref<2x8x128xf32, #tpu.memory_space<vmem>>, vector<2x8x128xf32>
    tpu.vector_store %arg9[%c0_25, %c0_26, %c0_27], %40 {strides = array<i32>} : memref<2x8x128xf32, #tpu.memory_space<vmem>>, vector<2x8x128xf32>,
    return
  }
  func.func @transform_0(%arg0: i32) -> (i32, i32, i32) {
    %c0_i32 = arith.constant 0 : i32
    %c0_i32_0 = arith.constant 0 : i32
    %c0_i32_1 = arith.constant 0 : i32
    return %arg0, %c0_i32, %c0_i32_0 : i32, i32, i32
  }
  func.func @transform_1(%arg0: i32) -> (i32, i32) {
    %c0_i32 = arith.constant 0 : i32
    %c0_i32_0 = arith.constant 0 : i32
    %c0_i32_1 = arith.constant 0 : i32
    return %c0_i32, %c0_i32_0 : i32, i32
  }
  func.func @transform_2(%arg0: i32) -> (i32, i32) {
    %c0_i32 = arith.constant 0 : i32
    %c0_i32_0 = arith.constant 0 : i32
    %c0_i32_1 = arith.constant 0 : i32
    return %c0_i32, %c0_i32_0 : i32, i32
  }
  func.func @transform_3(%arg0: i32) -> (i32, i32) {
    %c0_i32 = arith.constant 0 : i32
    %c0_i32_0 = arith.constant 0 : i32
    %c0_i32_1 = arith.constant 0 : i32
    return %c0_i32, %c0_i32_0 : i32, i32
  }
  func.func @transform_4(%arg0: i32) -> (i32, i32) {
    %c0_i32 = arith.constant 0 : i32
    %c0_i32_0 = arith.constant 0 : i32
    %c0_i32_1 = arith.constant 0 : i32
    return %c0_i32, %c0_i32_0 : i32, i32
  }
  func.func @transform_5(%arg0: i32) -> (i32, i32) {
    %c0_i32 = arith.constant 0 : i32
    %c0_i32_0 = arith.constant 0 : i32
    %c0_i32_1 = arith.constant 0 : i32
    return %c0_i32, %c0_i32_0 : i32, i32
  }
  func.func @transform_6(%arg0: i32) -> (i32, i32) {
    %c0_i32 = arith.constant 0 : i32
    %c0_i32_0 = arith.constant 0 : i32
    %c0_i32_1 = arith.constant 0 : i32
    return %c0_i32, %c0_i32_0 : i32, i32
  }
  func.func @transform_7(%arg0: i32) -> (i32, i32) {
    %c0_i32 = arith.constant 0 : i32
    %c0_i32_0 = arith.constant 0 : i32
    %c0_i32_1 = arith.constant 0 : i32
    return %c0_i32, %c0_i32_0 : i32, i32
  }
  func.func @transform_8(%arg0: i32) -> (i32, i32, i32) {
    %c0_i32 = arith.constant 0 : i32
    %c0_i32_0 = arith.constant 0 : i32
    %c0_i32_1 = arith.constant 0 : i32
    return %arg0, %c0_i32, %c0_i32_0 : i32, i32, i32
  }
}

</mosaic_0001>

<llo_original>
// kernel: tpu_custom_call.1
$region0: #{tpu_custom_call.1}
  #allocation0 [shape = 'u32[]', space=smem, size = 0x4, offset = 0x4, fixed_abs, tag = 'smem constant byte address 0x4 - core index']
  #allocation1 [shape = 'u32[144,128]{1,0:T(1,128)}', space=vmem, size = 0x12000, scoped, tag = 'internal scratch']
  %s0 = inlined_call_operand.hbm [shape: f32[2,8,128], index: 0, kind: input, shape index: {}]
  %s1 = inlined_call_operand.hbm [shape: f32[128,384], index: 1, kind: input, shape index: {}]
  %s2 = inlined_call_operand.hbm [shape: f32[128,128], index: 2, kind: input, shape index: {}]
  %s3 = inlined_call_operand.hbm [shape: f32[128,128], index: 3, kind: input, shape index: {}]
  %s4 = inlined_call_operand.hbm [shape: f32[128,128], index: 4, kind: input, shape index: {}]
  %s5 = inlined_call_operand.vmem [shape: f32[1,128], index: 5, kind: input, shape index: {}]
  %s6 = inlined_call_operand.hbm [shape: f32[128,128], index: 6, kind: input, shape index: {}]
  %s7 = inlined_call_operand.vmem [shape: f32[1,128], index: 7, kind: input, shape index: {}]
  %s8 = inlined_call_operand.hbm [shape: f32[2,8,128], index: 8, kind: output, shape index: {}]
  %s9 = sld [smem:[#allocation0]]
  $region66: #{tpu_custom_call.1} parent=0
    _
  %s11 = ssub.s32 1, %s9
  %s12 = scalar_select 0, %s11, %s9
  $region1: #{tpu_custom_call.1} parent=0
    #allocation2 [shape = 'u8[8192]{0}', space=vmem, size = 0x2000, scoped, tag = 'input window, operand 0, single buffered']
    #allocation3 [shape = 's32[1]{0}', space=sflag, size = 0x4, scoped, tag = 'scoped memory for tpu_custom_call.1']
    #allocation4 [shape = 's32[1]{0}', space=sflag, size = 0x4, scoped, tag = 'scoped memory for tpu_custom_call.1']
    #allocation5 [shape = 'u8[196608]{0}', space=vmem, size = 0x30000, scoped, tag = 'input window, operand 1, single buffered']
    #allocation6 [shape = 's32[1]{0}', space=sflag, size = 0x4, scoped, tag = 'scoped memory for tpu_custom_call.1']
    #allocation7 [shape = 'u8[65536]{0}', space=vmem, size = 0x10000, scoped, tag = 'input window, operand 2, single buffered']
    #allocation8 [shape = 'u8[65536]{0}', space=vmem, size = 0x10000, scoped, tag = 'input window, operand 3, single buffered']
    #allocation9 [shape = 's32[1]{0}', space=sflag, size = 0x4, scoped, tag = 'scoped memory for tpu_custom_call.1']
    #allocation10 [shape = 'u8[65536]{0}', space=vmem, size = 0x10000, scoped, tag = 'input window, operand 4, single buffered']
    #allocation11 [shape = 'u8[65536]{0}', space=vmem, size = 0x10000, scoped, tag = 'input window, operand 6, single buffered']
    #allocation12 [shape = 's32[1]{0}', space=sflag, size = 0x4, scoped, tag = 'scoped memory for tpu_custom_call.1']
    #allocation13 [shape = 'u8[8192]{0}', space=vmem, size = 0x2000, scoped, tag = 'output window, operand 0, single buffered']
    %13 = vsyncpa [#allocation3], 0
    %14 = vsyncpa [#allocation6], 0
    %15 = vsyncpa [#allocation9], 0
    %16 = vsyncpa [#allocation12], 0
    %17 = vsyncpa [#allocation4], 0
    // Predicated region
    $region2: #{tpu_custom_call.1} parent=1 // pred_check
      _
    $region3: #{tpu_custom_call.1} parent=1 // pred_check_branch
      %19 = sbr.rel (0) target = $region5
    $region4: #{tpu_custom_call.1} parent=1 // pred_region
      %s21 = ssub.s32 256, 256
      %22 = vsyncadd [#allocation3], %s21
      %s23 = sshll.u32 [#allocation2], 4
      %s24 = int_to_ptr.vmem [resolvable:$true] %s23
      %29 = dma.hbm_to_vmem [thread:$0]  %s0, 256, %s24, [#allocation3], 128, 128, 8
    $region5: #{tpu_custom_call.1} parent=1 // pred_fallthru
      _
    // Predicated region
    $region6: #{tpu_custom_call.1} parent=1 // pred_check
      _
    $region7: #{tpu_custom_call.1} parent=1 // pred_check_branch
      %31 = sbr.rel (0) target = $region9
    $region8: #{tpu_custom_call.1} parent=1 // pred_region
      %s33 = ssub.s32 6144, 6144
      %34 = vsyncadd [#allocation6], %s33
      %s35 = sshll.u32 [#allocation5], 4
      %s36 = int_to_ptr.vmem [resolvable:$true] %s35
      %41 = dma.hbm_to_vmem [thread:$0]  %s1, 6144, %s36, [#allocation6], 384, 384, 24
    $region9: #{tpu_custom_call.1} parent=1 // pred_fallthru
      _
    // Predicated region
    $region10: #{tpu_custom_call.1} parent=1 // pred_check
      _
    $region11: #{tpu_custom_call.1} parent=1 // pred_check_branch
      %43 = sbr.rel (0) target = $region13
    $region12: #{tpu_custom_call.1} parent=1 // pred_region
      %s45 = ssub.s32 2048, 2048
      %46 = vsyncadd [#allocation6], %s45
      %s47 = sshll.u32 [#allocation7], 4
      %s48 = int_to_ptr.vmem [resolvable:$true] %s47
      %53 = dma.hbm_to_vmem [thread:$0]  %s2, 2048, %s48, [#allocation6], 128, 128, 8
    $region13: #{tpu_custom_call.1} parent=1 // pred_fallthru
      _
    // Predicated region
    $region14: #{tpu_custom_call.1} parent=1 // pred_check
      _
    $region15: #{tpu_custom_call.1} parent=1 // pred_check_branch
      %55 = sbr.rel (0) target = $region17
    $region16: #{tpu_custom_call.1} parent=1 // pred_region
      %s57 = ssub.s32 2048, 2048
      %58 = vsyncadd [#allocation9], %s57
      %s59 = sshll.u32 [#allocation8], 4
      %s60 = int_to_ptr.vmem [resolvable:$true] %s59
      %65 = dma.hbm_to_vmem [thread:$0]  %s3, 2048, %s60, [#allocation9], 128, 128, 8
    $region17: #{tpu_custom_call.1} parent=1 // pred_fallthru
      _
    // Predicated region
    $region18: #{tpu_custom_call.1} parent=1 // pred_check
      _
    $region19: #{tpu_custom_call.1} parent=1 // pred_check_branch
      %67 = sbr.rel (0) target = $region21
    $region20: #{tpu_custom_call.1} parent=1 // pred_region
      %s69 = ssub.s32 2048, 2048
      %70 = vsyncadd [#allocation9], %s69
      %s71 = sshll.u32 [#allocation10], 4
      %s72 = int_to_ptr.vmem [resolvable:$true] %s71
      %77 = dma.hbm_to_vmem [thread:$0]  %s4, 2048, %s72, [#allocation9], 128, 128, 8
    $region21: #{tpu_custom_call.1} parent=1 // pred_fallthru
      _
    // Predicated region
    $region22: #{tpu_custom_call.1} parent=1 // pred_check
      _
    $region23: #{tpu_custom_call.1} parent=1 // pred_check_branch
      %79 = sbr.rel (0) target = $region25
    $region24: #{tpu_custom_call.1} parent=1 // pred_region
      _
    $region25: #{tpu_custom_call.1} parent=1 // pred_fallthru
      _
    // Predicated region
    $region26: #{tpu_custom_call.1} parent=1 // pred_check
      _
    $region27: #{tpu_custom_call.1} parent=1 // pred_check_branch
      %81 = sbr.rel (0) target = $region29
    $region28: #{tpu_custom_call.1} parent=1 // pred_region
      %s83 = ssub.s32 2048, 2048
      %84 = vsyncadd [#allocation12], %s83
      %s85 = sshll.u32 [#allocation11], 4
      %s86 = int_to_ptr.vmem [resolvable:$true] %s85
      %91 = dma.hbm_to_vmem [thread:$0]  %s6, 2048, %s86, [#allocation12], 128, 128, 8
    $region29: #{tpu_custom_call.1} parent=1 // pred_fallthru
      _
    // Predicated region
    $region30: #{tpu_custom_call.1} parent=1 // pred_check
      _
    $region31: #{tpu_custom_call.1} parent=1 // pred_check_branch
      %93 = sbr.rel (0) target = $region33
    $region32: #{tpu_custom_call.1} parent=1 // pred_region
      _
    $region33: #{tpu_custom_call.1} parent=1 // pred_fallthru
      _
    // Predicated region
    $region34: #{tpu_custom_call.1} parent=1 // pred_check
      _
    $region35: #{tpu_custom_call.1} parent=1 // pred_check_branch
      %95 = sbr.rel (0) target = $region37
    $region36: #{tpu_custom_call.1} parent=1 // pred_region
      %96 = dma.done [#allocation3], 256
    $region37: #{tpu_custom_call.1} parent=1 // pred_fallthru
      _
    // Predicated region
    $region38: #{tpu_custom_call.1} parent=1 // pred_check
      _
    $region39: #{tpu_custom_call.1} parent=1 // pred_check_branch
      %98 = sbr.rel (0) target = $region41
    $region40: #{tpu_custom_call.1} parent=1 // pred_region
      %99 = dma.done [#allocation6], 6144
    $region41: #{tpu_custom_call.1} parent=1 // pred_fallthru
      _
    // Predicated region
    $region42: #{tpu_custom_call.1} parent=1 // pred_check
      _
    $region43: #{tpu_custom_call.1} parent=1 // pred_check_branch
      %101 = sbr.rel (0) target = $region45
    $region44: #{tpu_custom_call.1} parent=1 // pred_region
      %102 = dma.done [#allocation6], 2048
    $region45: #{tpu_custom_call.1} parent=1 // pred_fallthru
      _
    // Predicated region
    $region46: #{tpu_custom_call.1} parent=1 // pred_check
      _
    $region47: #{tpu_custom_call.1} parent=1 // pred_check_branch
      %104 = sbr.rel (0) target = $region49
    $region48: #{tpu_custom_call.1} parent=1 // pred_region
      %105 = dma.done [#allocation9], 2048
    $region49: #{tpu_custom_call.1} parent=1 // pred_fallthru
      _
    // Predicated region
    $region50: #{tpu_custom_call.1} parent=1 // pred_check
      _
    $region51: #{tpu_custom_call.1} parent=1 // pred_check_branch
      %107 = sbr.rel (0) target = $region53
    $region52: #{tpu_custom_call.1} parent=1 // pred_region
      %108 = dma.done [#allocation9], 2048
    $region53: #{tpu_custom_call.1} parent=1 // pred_fallthru
      _
    // Predicated region
    $region54: #{tpu_custom_call.1} parent=1 // pred_check
      _
    $region55: #{tpu_custom_call.1} parent=1 // pred_check_branch
      %110 = sbr.rel (0) target = $region57
    $region56: #{tpu_custom_call.1} parent=1 // pred_region
      %111 = dma.done [#allocation12], 2048
    $region57: #{tpu_custom_call.1} parent=1 // pred_fallthru
      _
    %v112 = vld [vmem:[#allocation2] sm:$0xff]
    %v113 = vld [vmem:[#allocation2 + $0x8] sm:$0xff]
    %v114 = vld [vmem:[#allocation5] sm:$0xff]
    %v115 = vld [vmem:[#allocation5 + $0x8] sm:$0xff]
    %v116 = vld [vmem:[#allocation5 + $0x10] sm:$0xff]
    %v117 = vld [vmem:[#allocation5 + $0x18] sm:$0xff]
    %v118 = vld [vmem:[#allocation5 + $0x20] sm:$0xff]
    %v119 = vld [vmem:[#allocation5 + $0x28] sm:$0xff]
    %v120 = vld [vmem:[#allocation5 + $0x30] sm:$0xff]
    %v121 = vld [vmem:[#allocation5 + $0x38] sm:$0xff]
    %v122 = vld [vmem:[#allocation5 + $0x40] sm:$0xff]
    %v123 = vld [vmem:[#allocation5 + $0x48] sm:$0xff]
    %v124 = vld [vmem:[#allocation5 + $0x50] sm:$0xff]
    %v125 = vld [vmem:[#allocation5 + $0x58] sm:$0xff]
    %v126 = vld [vmem:[#allocation5 + $0x60] sm:$0xff]
    %v127 = vld [vmem:[#allocation5 + $0x68] sm:$0xff]
    %v128 = vld [vmem:[#allocation5 + $0x70] sm:$0xff]
    %v129 = vld [vmem:[#allocation5 + $0x78] sm:$0xff]
    %v130 = vld [vmem:[#allocation5 + $0x80] sm:$0xff]
    %v131 = vld [vmem:[#allocation5 + $0x88] sm:$0xff]
    %v132 = vld [vmem:[#allocation5 + $0x90] sm:$0xff]
    %v133 = vld [vmem:[#allocation5 + $0x98] sm:$0xff]
    %v134 = vld [vmem:[#allocation5 + $0xa0] sm:$0xff]
    %v135 = vld [vmem:[#allocation5 + $0xa8] sm:$0xff]
    %v136 = vld [vmem:[#allocation5 + $0xb0] sm:$0xff]
    %v137 = vld [vmem:[#allocation5 + $0xb8] sm:$0xff]
    %v138 = vld [vmem:[#allocation5 + $0xc0] sm:$0xff]
    %v139 = vld [vmem:[#allocation5 + $0xc8] sm:$0xff]
    %v140 = vld [vmem:[#allocation5 + $0xd0] sm:$0xff]
    %v141 = vld [vmem:[#allocation5 + $0xd8] sm:$0xff]
    %v142 = vld [vmem:[#allocation5 + $0xe0] sm:$0xff]
    %v143 = vld [vmem:[#allocation5 + $0xe8] sm:$0xff]
    %v144 = vld [vmem:[#allocation5 + $0xf0] sm:$0xff]
    %v145 = vld [vmem:[#allocation5 + $0xf8] sm:$0xff]
    %v146 = vld [vmem:[#allocation5 + $0x100] sm:$0xff]
    %v147 = vld [vmem:[#allocation5 + $0x108] sm:$0xff]
    %v148 = vld [vmem:[#allocation5 + $0x110] sm:$0xff]
    %v149 = vld [vmem:[#allocation5 + $0x118] sm:$0xff]
    %v150 = vld [vmem:[#allocation5 + $0x120] sm:$0xff]
    %v151 = vld [vmem:[#allocation5 + $0x128] sm:$0xff]
    %v152 = vld [vmem:[#allocation5 + $0x130] sm:$0xff]
    %v153 = vld [vmem:[#allocation5 + $0x138] sm:$0xff]
    %v154 = vld [vmem:[#allocation5 + $0x140] sm:$0xff]
    %v155 = vld [vmem:[#allocation5 + $0x148] sm:$0xff]
    %v156 = vld [vmem:[#allocation5 + $0x150] sm:$0xff]
    %v157 = vld [vmem:[#allocation5 + $0x158] sm:$0xff]
    %v158 = vld [vmem:[#allocation5 + $0x160] sm:$0xff]
    %v159 = vld [vmem:[#allocation5 + $0x168] sm:$0xff]
    %v160 = vld [vmem:[#allocation5 + $0x170] sm:$0xff]
    %v161 = vld [vmem:[#allocation5 + $0x178] sm:$0xff]
    %162 = vmatprep.subr.mxu0 %v160
    %163 = vmatpush1.msra.mxu0 %v159
    %164 = vmatprep.subr.mxu0 %v157
    %165 = vmatpush1.msra.mxu0 %v156
    %166 = vmatprep.subr.mxu0 %v154
    %167 = vmatpush1.msra.mxu0 %v153
    %168 = vmatprep.subr.mxu0 %v151
    %169 = vmatpush1.msra.mxu0 %v150
    %170 = vmatprep.subr.mxu0 %v148
    %171 = vmatpush1.msra.mxu0 %v147
    %172 = vmatprep.subr.mxu0 %v145
    %173 = vmatpush1.msra.mxu0 %v144
    %174 = vmatprep.subr.mxu0 %v142
    %175 = vmatpush1.msra.mxu0 %v141
    %176 = vmatprep.subr.mxu0 %v139
    %177 = vmatpush1.msra.mxu0 %v138
    %178 = vmatprep.subr.mxu0 %v136
    %179 = vmatpush1.msra.mxu0 %v135
    %180 = vmatprep.subr.mxu0 %v133
    %181 = vmatpush1.msra.mxu0 %v132
    %182 = vmatprep.subr.mxu0 %v130
    %183 = vmatpush1.msra.mxu0 %v129
    %184 = vmatprep.subr.mxu0 %v127
    %185 = vmatpush1.msra.mxu0 %v126
    %186 = vmatprep.subr.mxu0 %v124
    %187 = vmatpush1.msra.mxu0 %v123
    %188 = vmatprep.subr.mxu0 %v121
    %189 = vmatpush1.msra.mxu0 %v120
    %190 = vmatprep.subr.mxu0 %v118
    %191 = vmatpush1.msra.mxu0 %v117
    %192 = vmatprep.subr.mxu0 %v115
    %193 = vmatpush1.msra.mxu0 %v114
    %194 = vmatprep.subr.mxu0 0.0
    %195 = vmatpush2.msra.mxu0 0.0
    %196 = vmatprep.subr.mxu0 0.0
    %197 = vmatpush2.msra.mxu0 0.0
    %198 = vmatprep.subr.mxu0 0.0
    %199 = vmatpush2.msra.mxu0 0.0
    %200 = vmatprep.subr.mxu0 0.0
    %201 = vmatpush2.msra.mxu0 0.0
    %202 = vmatprep.subr.mxu0 0.0
    %203 = vmatpush2.msra.mxu0 0.0
    %204 = vmatprep.subr.mxu0 0.0
    %205 = vmatpush2.msra.mxu0 0.0
    %206 = vmatprep.subr.mxu0 0.0
    %207 = vmatpush2.msra.mxu0 0.0
    %208 = vmatprep.subr.mxu0 0.0
    %209 = vmatpush2.msra.mxu0 0.0
    %210 = vmatprep.subr.mxu0 0.0
    %211 = vmatpush2.msra.mxu0 0.0
    %212 = vmatprep.subr.mxu0 0.0
    %213 = vmatpush2.msra.mxu0 0.0
    %214 = vmatprep.subr.mxu0 0.0
    %215 = vmatpush2.msra.mxu0 0.0
    %216 = vmatprep.subr.mxu0 0.0
    %217 = vmatpush2.msra.mxu0 0.0
    %218 = vmatprep.subr.mxu0 0.0
    %219 = vmatpush2.msra.mxu0 0.0
    %220 = vmatprep.subr.mxu0 0.0
    %221 = vmatpush2.msra.mxu0 0.0
    %222 = vmatprep.subr.mxu0 0.0
    %223 = vmatpush2.msra.mxu0 0.0
    %224 = vmatprep.subr.mxu0 0.0
    %225 = vmatpush2.msra.mxu0 0.0
    %226 = vmatprep.mubr.f32.mxu0 0.0
    %227 = vmatmul.mubr.f32.gmra.mxu0 %v112
    %v228 = vpop.f32.mrf.mxu0
    %v229 = vadd.f32 0.0, %v228
    %v230 = vpop.f32.mrf.mxu0
    %v231 = vadd.f32 0.0, %v230
    %232 = vmatprep.mubr.f32.mxu0 0.0
    %233 = vmatmul.mubr.f32.gmra.mxu0 %v113
    %v234 = vpop.f32.mrf.mxu0
    %v235 = vadd.f32 0.0, %v234
    %v236 = vpop.f32.mrf.mxu0
    %v237 = vadd.f32 0.0, %v236
    %238 = vdwg.mxu0
    %239 = vmatprep.subr.mxu0 0.0
    %240 = vmatpush1.msra.mxu0 %v161
    %241 = vmatprep.subr.mxu0 0.0
    %242 = vmatpush1.msra.mxu0 %v158
    %243 = vmatprep.subr.mxu0 0.0
    %244 = vmatpush1.msra.mxu0 %v155
    %245 = vmatprep.subr.mxu0 0.0
    %246 = vmatpush1.msra.mxu0 %v152
    %247 = vmatprep.subr.mxu0 0.0
    %248 = vmatpush1.msra.mxu0 %v149
    %249 = vmatprep.subr.mxu0 0.0
    %250 = vmatpush1.msra.mxu0 %v146
    %251 = vmatprep.subr.mxu0 0.0
    %252 = vmatpush1.msra.mxu0 %v143
    %253 = vmatprep.subr.mxu0 0.0
    %254 = vmatpush1.msra.mxu0 %v140
    %255 = vmatprep.subr.mxu0 0.0
    %256 = vmatpush1.msra.mxu0 %v137
    %257 = vmatprep.subr.mxu0 0.0
    %258 = vmatpush1.msra.mxu0 %v134
    %259 = vmatprep.subr.mxu0 0.0
    %260 = vmatpush1.msra.mxu0 %v131
    %261 = vmatprep.subr.mxu0 0.0
    %262 = vmatpush1.msra.mxu0 %v128
    %263 = vmatprep.subr.mxu0 0.0
    %264 = vmatpush1.msra.mxu0 %v125
    %265 = vmatprep.subr.mxu0 0.0
    %266 = vmatpush1.msra.mxu0 %v122
    %267 = vmatprep.subr.mxu0 0.0
    %268 = vmatpush1.msra.mxu0 %v119
    %269 = vmatprep.subr.mxu0 0.0
    %270 = vmatpush1.msra.mxu0 %v116
    %271 = vmatprep.subr.mxu0 0.0
    %272 = vmatpush2.msra.mxu0 0.0
    %273 = vmatprep.subr.mxu0 0.0
    %274 = vmatpush2.msra.mxu0 0.0
    %275 = vmatprep.subr.mxu0 0.0
    %276 = vmatpush2.msra.mxu0 0.0
    %277 = vmatprep.subr.mxu0 0.0
    %278 = vmatpush2.msra.mxu0 0.0
    %279 = vmatprep.subr.mxu0 0.0
    %280 = vmatpush2.msra.mxu0 0.0
    %281 = vmatprep.subr.mxu0 0.0
    %282 = vmatpush2.msra.mxu0 0.0
    %283 = vmatprep.subr.mxu0 0.0
    %284 = vmatpush2.msra.mxu0 0.0
    %285 = vmatprep.subr.mxu0 0.0
    %286 = vmatpush2.msra.mxu0 0.0
    %287 = vmatprep.subr.mxu0 0.0
    %288 = vmatpush2.msra.mxu0 0.0
    %289 = vmatprep.subr.mxu0 0.0
    %290 = vmatpush2.msra.mxu0 0.0
    %291 = vmatprep.subr.mxu0 0.0
    %292 = vmatpush2.msra.mxu0 0.0
    %293 = vmatprep.subr.mxu0 0.0
    %294 = vmatpush2.msra.mxu0 0.0
    %295 = vmatprep.subr.mxu0 0.0
    %296 = vmatpush2.msra.mxu0 0.0
    %297 = vmatprep.subr.mxu0 0.0
    %298 = vmatpush2.msra.mxu0 0.0
    %299 = vmatprep.subr.mxu0 0.0
    %300 = vmatpush2.msra.mxu0 0.0
    %301 = vmatprep.subr.mxu0 0.0
    %302 = vmatpush2.msra.mxu0 0.0
    %303 = vmatprep.mubr.f32.mxu0 0.0
    %304 = vmatmul.mubr.f32.gmra.mxu0 %v112
    %v305 = vpop.f32.mrf.mxu0
    %v306 = vadd.f32 0.0, %v305
    %v307 = vpop.f32.mrf.mxu0
    %308 = vmatprep.mubr.f32.mxu0 0.0
    %309 = vmatmul.mubr.f32.gmra.mxu0 %v113
    %v310 = vpop.f32.mrf.mxu0
    %v311 = vadd.f32 0.0, %v310
    %v312 = vpop.f32.mrf.mxu0
    %313 = vdwg.mxu0
    %314 = vmatprep.subr.mxu0 0.0
    %315 = vmatpush1.xpose.msra.mxu0 0.0
    %316 = vmatprep.subr.mxu0 0.0
    %317 = vmatpush1.xpose.msra.mxu0 0.0
    %318 = vmatprep.subr.mxu0 0.0
    %319 = vmatpush1.xpose.msra.mxu0 0.0
    %320 = vmatprep.subr.mxu0 0.0
    %321 = vmatpush1.xpose.msra.mxu0 0.0
    %322 = vmatprep.subr.mxu0 0.0
    %323 = vmatpush1.xpose.msra.mxu0 0.0
    %324 = vmatprep.subr.mxu0 0.0
    %325 = vmatpush1.xpose.msra.mxu0 0.0
    %326 = vmatprep.subr.mxu0 0.0
    %327 = vmatpush1.xpose.msra.mxu0 0.0
    %328 = vmatprep.subr.mxu0 0.0
    %329 = vmatpush1.xpose.msra.mxu0 0.0
    %330 = vmatprep.subr.mxu0 0.0
    %331 = vmatpush1.xpose.msra.mxu0 0.0
    %332 = vmatprep.subr.mxu0 0.0
    %333 = vmatpush1.xpose.msra.mxu0 0.0
    %334 = vmatprep.subr.mxu0 0.0
    %335 = vmatpush1.xpose.msra.mxu0 0.0
    %336 = vmatprep.subr.mxu0 0.0
    %337 = vmatpush1.xpose.msra.mxu0 0.0
    %338 = vmatprep.subr.mxu0 0.0
    %339 = vmatpush1.xpose.msra.mxu0 0.0
    %340 = vmatprep.subr.mxu0 0.0
    %341 = vmatpush1.xpose.msra.mxu0 0.0
    %342 = vmatprep.subr.mxu0 0.0
    %343 = vmatpush1.xpose.msra.mxu0 0.0
    %344 = vmatprep.subr.mxu0 0.0
    %345 = vmatpush1.xpose.msra.mxu0 %v231
    %346 = vmatprep.subr.mxu0 0.0
    %347 = vmatpush2.xpose.msra.mxu0 0.0
    %348 = vmatprep.subr.mxu0 0.0
    %349 = vmatpush2.xpose.msra.mxu0 0.0
    %350 = vmatprep.subr.mxu0 0.0
    %351 = vmatpush2.xpose.msra.mxu0 0.0
    %352 = vmatprep.subr.mxu0 0.0
    %353 = vmatpush2.xpose.msra.mxu0 0.0
    %354 = vmatprep.subr.mxu0 0.0
    %355 = vmatpush2.xpose.msra.mxu0 0.0
    %356 = vmatprep.subr.mxu0 0.0
    %357 = vmatpush2.xpose.msra.mxu0 0.0
    %358 = vmatprep.subr.mxu0 0.0
    %359 = vmatpush2.xpose.msra.mxu0 0.0
    %360 = vmatprep.subr.mxu0 0.0
    %361 = vmatpush2.xpose.msra.mxu0 0.0
    %362 = vmatprep.subr.mxu0 0.0
    %363 = vmatpush2.xpose.msra.mxu0 0.0
    %364 = vmatprep.subr.mxu0 0.0
    %365 = vmatpush2.xpose.msra.mxu0 0.0
    %366 = vmatprep.subr.mxu0 0.0
    %367 = vmatpush2.xpose.msra.mxu0 0.0
    %368 = vmatprep.subr.mxu0 0.0
    %369 = vmatpush2.xpose.msra.mxu0 0.0
    %370 = vmatprep.subr.mxu0 0.0
    %371 = vmatpush2.xpose.msra.mxu0 0.0
    %372 = vmatprep.subr.mxu0 0.0
    %373 = vmatpush2.xpose.msra.mxu0 0.0
    %374 = vmatprep.subr.mxu0 0.0
    %375 = vmatpush2.xpose.msra.mxu0 0.0
    %376 = vmatprep.subr.mxu0 0.0
    %377 = vmatpush2.xpose.msra.mxu0 0.0
    %378 = vmatprep.mubr.f32.mxu0 0.0
    %379 = vmatmul.mubr.f32.gmra.mxu0 %v229
    %v380 = vpop.f32.mrf.mxu0
    %v381 = vadd.f32 0.0, %v380
    %v382 = vpop.f32.mrf.mxu0
    %383 = vdwg.mxu0
    %384 = vmatprep.subr.mxu0 0.0
    %385 = vmatpush1.xpose.msra.mxu0 0.0
    %386 = vmatprep.subr.mxu0 0.0
    %387 = vmatpush1.xpose.msra.mxu0 0.0
    %388 = vmatprep.subr.mxu0 0.0
    %389 = vmatpush1.xpose.msra.mxu0 0.0
    %390 = vmatprep.subr.mxu0 0.0
    %391 = vmatpush1.xpose.msra.mxu0 0.0
    %392 = vmatprep.subr.mxu0 0.0
    %393 = vmatpush1.xpose.msra.mxu0 0.0
    %394 = vmatprep.subr.mxu0 0.0
    %395 = vmatpush1.xpose.msra.mxu0 0.0
    %396 = vmatprep.subr.mxu0 0.0
    %397 = vmatpush1.xpose.msra.mxu0 0.0
    %398 = vmatprep.subr.mxu0 0.0
    %399 = vmatpush1.xpose.msra.mxu0 0.0
    %400 = vmatprep.subr.mxu0 0.0
    %401 = vmatpush1.xpose.msra.mxu0 0.0
    %402 = vmatprep.subr.mxu0 0.0
    %403 = vmatpush1.xpose.msra.mxu0 0.0
    %404 = vmatprep.subr.mxu0 0.0
    %405 = vmatpush1.xpose.msra.mxu0 0.0
    %406 = vmatprep.subr.mxu0 0.0
    %407 = vmatpush1.xpose.msra.mxu0 0.0
    %408 = vmatprep.subr.mxu0 0.0
    %409 = vmatpush1.xpose.msra.mxu0 0.0
    %410 = vmatprep.subr.mxu0 0.0
    %411 = vmatpush1.xpose.msra.mxu0 0.0
    %412 = vmatprep.subr.mxu0 0.0
    %413 = vmatpush1.xpose.msra.mxu0 0.0
    %414 = vmatprep.subr.mxu0 0.0
    %415 = vmatpush1.xpose.msra.mxu0 %v237
    %416 = vmatprep.subr.mxu0 0.0
    %417 = vmatpush2.xpose.msra.mxu0 0.0
    %418 = vmatprep.subr.mxu0 0.0
    %419 = vmatpush2.xpose.msra.mxu0 0.0
    %420 = vmatprep.subr.mxu0 0.0
    %421 = vmatpush2.xpose.msra.mxu0 0.0
    %422 = vmatprep.subr.mxu0 0.0
    %423 = vmatpush2.xpose.msra.mxu0 0.0
    %424 = vmatprep.subr.mxu0 0.0
    %425 = vmatpush2.xpose.msra.mxu0 0.0
    %426 = vmatprep.subr.mxu0 0.0
    %427 = vmatpush2.xpose.msra.mxu0 0.0
    %428 = vmatprep.subr.mxu0 0.0
    %429 = vmatpush2.xpose.msra.mxu0 0.0
    %430 = vmatprep.subr.mxu0 0.0
    %431 = vmatpush2.xpose.msra.mxu0 0.0
    %432 = vmatprep.subr.mxu0 0.0
    %433 = vmatpush2.xpose.msra.mxu0 0.0
    %434 = vmatprep.subr.mxu0 0.0
    %435 = vmatpush2.xpose.msra.mxu0 0.0
    %436 = vmatprep.subr.mxu0 0.0
    %437 = vmatpush2.xpose.msra.mxu0 0.0
    %438 = vmatprep.subr.mxu0 0.0
    %439 = vmatpush2.xpose.msra.mxu0 0.0
    %440 = vmatprep.subr.mxu0 0.0
    %441 = vmatpush2.xpose.msra.mxu0 0.0
    %442 = vmatprep.subr.mxu0 0.0
    %443 = vmatpush2.xpose.msra.mxu0 0.0
    %444 = vmatprep.subr.mxu0 0.0
    %445 = vmatpush2.xpose.msra.mxu0 0.0
    %446 = vmatprep.subr.mxu0 0.0
    %447 = vmatpush2.xpose.msra.mxu0 0.0
    %448 = vmatprep.mubr.f32.mxu0 0.0
    %449 = vmatmul.mubr.f32.gmra.mxu0 %v235
    %v450 = vpop.f32.mrf.mxu0
    %v451 = vadd.f32 0.0, %v450
    %v452 = vpop.f32.mrf.mxu0
    %453 = vdwg.mxu0
    %vm454 = vcmask 64512
    %v455 = vsel %vm454, %v381, -inf
    %456 = vmax.xlane.f32.xlu0 %v455
    %v457 = vpop.xlane.xlu0 %456
    %v458 = vsel %vm454, %v451, -inf
    %459 = vmax.xlane.f32.xlu0 %v458
    %v460 = vpop.xlane.xlu0 %459
    %v461 = vsub.f32 %v381, %v457
    %v462 = vsub.f32 %v451, %v460
    %v463 = vmul.f32 %v461, 1.442695
    %v464 = vpow.pop %v463
    %v465 = vmul.f32 %v462, 1.442695
    %v466 = vpow.pop %v465
    %v467 = vsel %vm454, %v464, 0.0
    %468 = vadd.xlane.f32.xlu0 %v467
    %v469 = vpop.xlane.xlu0 %468
    %v470 = vsel %vm454, %v466, 0.0
    %471 = vadd.xlane.f32.xlu0 %v470
    %v472 = vpop.xlane.xlu0 %471
    %v473 = vrcp.pop %v469
    %v474 = vrcp.pop %v472
    %v475 = vmul.f32 %v464, %v473
    %v476 = vmul.f32 %v466, %v474
    %v478 = vsel %vm454, %v475, 0
    %480 = vmatprep.subr.mxu0 0.0
    %481 = vmatpush1.msra.mxu0 0.0
    %482 = vmatprep.subr.mxu0 0.0
    %483 = vmatpush1.msra.mxu0 0.0
    %484 = vmatprep.subr.mxu0 0.0
    %485 = vmatpush1.msra.mxu0 0.0
    %486 = vmatprep.subr.mxu0 0.0
    %487 = vmatpush1.msra.mxu0 0.0
    %488 = vmatprep.subr.mxu0 0.0
    %489 = vmatpush1.msra.mxu0 0.0
    %490 = vmatprep.subr.mxu0 0.0
    %491 = vmatpush1.msra.mxu0 0.0
    %492 = vmatprep.subr.mxu0 0.0
    %493 = vmatpush1.msra.mxu0 0.0
    %494 = vmatprep.subr.mxu0 0.0
    %495 = vmatpush1.msra.mxu0 0.0
    %496 = vmatprep.subr.mxu0 0.0
    %497 = vmatpush1.msra.mxu0 0.0
    %498 = vmatprep.subr.mxu0 0.0
    %499 = vmatpush1.msra.mxu0 0.0
    %500 = vmatprep.subr.mxu0 0.0
    %501 = vmatpush1.msra.mxu0 0.0
    %502 = vmatprep.subr.mxu0 0.0
    %503 = vmatpush1.msra.mxu0 0.0
    %504 = vmatprep.subr.mxu0 0.0
    %505 = vmatpush1.msra.mxu0 0.0
    %506 = vmatprep.subr.mxu0 0.0
    %507 = vmatpush1.msra.mxu0 0.0
    %508 = vmatprep.subr.mxu0 0.0
    %509 = vmatpush1.msra.mxu0 0.0
    %510 = vmatprep.subr.mxu0 0.0
    %511 = vmatpush1.msra.mxu0 %v306
    %512 = vmatprep.subr.mxu0 0.0
    %513 = vmatpush2.msra.mxu0 0.0
    %514 = vmatprep.subr.mxu0 0.0
    %515 = vmatpush2.msra.mxu0 0.0
    %516 = vmatprep.subr.mxu0 0.0
    %517 = vmatpush2.msra.mxu0 0.0
    %518 = vmatprep.subr.mxu0 0.0
    %519 = vmatpush2.msra.mxu0 0.0
    %520 = vmatprep.subr.mxu0 0.0
    %521 = vmatpush2.msra.mxu0 0.0
    %522 = vmatprep.subr.mxu0 0.0
    %523 = vmatpush2.msra.mxu0 0.0
    %524 = vmatprep.subr.mxu0 0.0
    %525 = vmatpush2.msra.mxu0 0.0
    %526 = vmatprep.subr.mxu0 0.0
    %527 = vmatpush2.msra.mxu0 0.0
    %528 = vmatprep.subr.mxu0 0.0
    %529 = vmatpush2.msra.mxu0 0.0
    %530 = vmatprep.subr.mxu0 0.0
    %531 = vmatpush2.msra.mxu0 0.0
    %532 = vmatprep.subr.mxu0 0.0
    %533 = vmatpush2.msra.mxu0 0.0
    %534 = vmatprep.subr.mxu0 0.0
    %535 = vmatpush2.msra.mxu0 0.0
    %536 = vmatprep.subr.mxu0 0.0
    %537 = vmatpush2.msra.mxu0 0.0
    %538 = vmatprep.subr.mxu0 0.0
    %539 = vmatpush2.msra.mxu0 0.0
    %540 = vmatprep.subr.mxu0 0.0
    %541 = vmatpush2.msra.mxu0 0.0
    %542 = vmatprep.subr.mxu0 0.0
    %543 = vmatpush2.msra.mxu0 0.0
    %544 = vmatprep.mubr.f32.mxu0 0.0
    %545 = vmatmul.mubr.f32.gmra.mxu0 %v478
    %v546 = vpop.f32.mrf.mxu0
    %v547 = vadd.f32 0.0, %v546
    %v548 = vpop.f32.mrf.mxu0
    %549 = vdwg.mxu0
    %v551 = vsel %vm454, %v476, 0
    %553 = vmatprep.subr.mxu0 0.0
    %554 = vmatpush1.msra.mxu0 0.0
    %555 = vmatprep.subr.mxu0 0.0
    %556 = vmatpush1.msra.mxu0 0.0
    %557 = vmatprep.subr.mxu0 0.0
    %558 = vmatpush1.msra.mxu0 0.0
    %559 = vmatprep.subr.mxu0 0.0
    %560 = vmatpush1.msra.mxu0 0.0
    %561 = vmatprep.subr.mxu0 0.0
    %562 = vmatpush1.msra.mxu0 0.0
    %563 = vmatprep.subr.mxu0 0.0
    %564 = vmatpush1.msra.mxu0 0.0
    %565 = vmatprep.subr.mxu0 0.0
    %566 = vmatpush1.msra.mxu0 0.0
    %567 = vmatprep.subr.mxu0 0.0
    %568 = vmatpush1.msra.mxu0 0.0
    %569 = vmatprep.subr.mxu0 0.0
    %570 = vmatpush1.msra.mxu0 0.0
    %571 = vmatprep.subr.mxu0 0.0
    %572 = vmatpush1.msra.mxu0 0.0
    %573 = vmatprep.subr.mxu0 0.0
    %574 = vmatpush1.msra.mxu0 0.0
    %575 = vmatprep.subr.mxu0 0.0
    %576 = vmatpush1.msra.mxu0 0.0
    %577 = vmatprep.subr.mxu0 0.0
    %578 = vmatpush1.msra.mxu0 0.0
    %579 = vmatprep.subr.mxu0 0.0
    %580 = vmatpush1.msra.mxu0 0.0
    %581 = vmatprep.subr.mxu0 0.0
    %582 = vmatpush1.msra.mxu0 0.0
    %583 = vmatprep.subr.mxu0 0.0
    %584 = vmatpush1.msra.mxu0 %v311
    %585 = vmatprep.subr.mxu0 0.0
    %586 = vmatpush2.msra.mxu0 0.0
    %587 = vmatprep.subr.mxu0 0.0
    %588 = vmatpush2.msra.mxu0 0.0
    %589 = vmatprep.subr.mxu0 0.0
    %590 = vmatpush2.msra.mxu0 0.0
    %591 = vmatprep.subr.mxu0 0.0
    %592 = vmatpush2.msra.mxu0 0.0
    %593 = vmatprep.subr.mxu0 0.0
    %594 = vmatpush2.msra.mxu0 0.0
    %595 = vmatprep.subr.mxu0 0.0
    %596 = vmatpush2.msra.mxu0 0.0
    %597 = vmatprep.subr.mxu0 0.0
    %598 = vmatpush2.msra.mxu0 0.0
    %599 = vmatprep.subr.mxu0 0.0
    %600 = vmatpush2.msra.mxu0 0.0
    %601 = vmatprep.subr.mxu0 0.0
    %602 = vmatpush2.msra.mxu0 0.0
    %603 = vmatprep.subr.mxu0 0.0
    %604 = vmatpush2.msra.mxu0 0.0
    %605 = vmatprep.subr.mxu0 0.0
    %606 = vmatpush2.msra.mxu0 0.0
    %607 = vmatprep.subr.mxu0 0.0
    %608 = vmatpush2.msra.mxu0 0.0
    %609 = vmatprep.subr.mxu0 0.0
    %610 = vmatpush2.msra.mxu0 0.0
    %611 = vmatprep.subr.mxu0 0.0
    %612 = vmatpush2.msra.mxu0 0.0
    %613 = vmatprep.subr.mxu0 0.0
    %614 = vmatpush2.msra.mxu0 0.0
    %615 = vmatprep.subr.mxu0 0.0
    %616 = vmatpush2.msra.mxu0 0.0
    %617 = vmatprep.mubr.f32.mxu0 0.0
    %618 = vmatmul.mubr.f32.gmra.mxu0 %v551
    %v619 = vpop.f32.mrf.mxu0
    %v620 = vadd.f32 0.0, %v619
    %v621 = vpop.f32.mrf.mxu0
    %622 = vdwg.mxu0
    %v623 = vld [vmem:[#allocation7] sm:$0xff]
    %v624 = vld [vmem:[#allocation7 + $0x8] sm:$0xff]
    %v625 = vld [vmem:[#allocation7 + $0x10] sm:$0xff]
    %v626 = vld [vmem:[#allocation7 + $0x18] sm:$0xff]
    %v627 = vld [vmem:[#allocation7 + $0x20] sm:$0xff]
    %v628 = vld [vmem:[#allocation7 + $0x28] sm:$0xff]
    %v629 = vld [vmem:[#allocation7 + $0x30] sm:$0xff]
    %v630 = vld [vmem:[#allocation7 + $0x38] sm:$0xff]
    %v631 = vld [vmem:[#allocation7 + $0x40] sm:$0xff]
    %v632 = vld [vmem:[#allocation7 + $0x48] sm:$0xff]
    %v633 = vld [vmem:[#allocation7 + $0x50] sm:$0xff]
    %v634 = vld [vmem:[#allocation7 + $0x58] sm:$0xff]
    %v635 = vld [vmem:[#allocation7 + $0x60] sm:$0xff]
    %v636 = vld [vmem:[#allocation7 + $0x68] sm:$0xff]
    %v637 = vld [vmem:[#allocation7 + $0x70] sm:$0xff]
    %v638 = vld [vmem:[#allocation7 + $0x78] sm:$0xff]
    %639 = vmatprep.subr.mxu0 0.0
    %640 = vmatpush1.msra.mxu0 %v638
    %641 = vmatprep.subr.mxu0 0.0
    %642 = vmatpush1.msra.mxu0 %v637
    %643 = vmatprep.subr.mxu0 0.0
    %644 = vmatpush1.msra.mxu0 %v636
    %645 = vmatprep.subr.mxu0 0.0
    %646 = vmatpush1.msra.mxu0 %v635
    %647 = vmatprep.subr.mxu0 0.0
    %648 = vmatpush1.msra.mxu0 %v634
    %649 = vmatprep.subr.mxu0 0.0
    %650 = vmatpush1.msra.mxu0 %v633
    %651 = vmatprep.subr.mxu0 0.0
    %652 = vmatpush1.msra.mxu0 %v632
    %653 = vmatprep.subr.mxu0 0.0
    %654 = vmatpush1.msra.mxu0 %v631
    %655 = vmatprep.subr.mxu0 0.0
    %656 = vmatpush1.msra.mxu0 %v630
    %657 = vmatprep.subr.mxu0 0.0
    %658 = vmatpush1.msra.mxu0 %v629
    %659 = vmatprep.subr.mxu0 0.0
    %660 = vmatpush1.msra.mxu0 %v628
    %661 = vmatprep.subr.mxu0 0.0
    %662 = vmatpush1.msra.mxu0 %v627
    %663 = vmatprep.subr.mxu0 0.0
    %664 = vmatpush1.msra.mxu0 %v626
    %665 = vmatprep.subr.mxu0 0.0
    %666 = vmatpush1.msra.mxu0 %v625
    %667 = vmatprep.subr.mxu0 0.0
    %668 = vmatpush1.msra.mxu0 %v624
    %669 = vmatprep.subr.mxu0 0.0
    %670 = vmatpush1.msra.mxu0 %v623
    %671 = vmatprep.subr.mxu0 0.0
    %672 = vmatpush2.msra.mxu0 0.0
    %673 = vmatprep.subr.mxu0 0.0
    %674 = vmatpush2.msra.mxu0 0.0
    %675 = vmatprep.subr.mxu0 0.0
    %676 = vmatpush2.msra.mxu0 0.0
    %677 = vmatprep.subr.mxu0 0.0
    %678 = vmatpush2.msra.mxu0 0.0
    %679 = vmatprep.subr.mxu0 0.0
    %680 = vmatpush2.msra.mxu0 0.0
    %681 = vmatprep.subr.mxu0 0.0
    %682 = vmatpush2.msra.mxu0 0.0
    %683 = vmatprep.subr.mxu0 0.0
    %684 = vmatpush2.msra.mxu0 0.0
    %685 = vmatprep.subr.mxu0 0.0
    %686 = vmatpush2.msra.mxu0 0.0
    %687 = vmatprep.subr.mxu0 0.0
    %688 = vmatpush2.msra.mxu0 0.0
    %689 = vmatprep.subr.mxu0 0.0
    %690 = vmatpush2.msra.mxu0 0.0
    %691 = vmatprep.subr.mxu0 0.0
    %692 = vmatpush2.msra.mxu0 0.0
    %693 = vmatprep.subr.mxu0 0.0
    %694 = vmatpush2.msra.mxu0 0.0
    %695 = vmatprep.subr.mxu0 0.0
    %696 = vmatpush2.msra.mxu0 0.0
    %697 = vmatprep.subr.mxu0 0.0
    %698 = vmatpush2.msra.mxu0 0.0
    %699 = vmatprep.subr.mxu0 0.0
    %700 = vmatpush2.msra.mxu0 0.0
    %701 = vmatprep.subr.mxu0 0.0
    %702 = vmatpush2.msra.mxu0 0.0
    %703 = vmatprep.mubr.f32.mxu0 0.0
    %704 = vmatmul.mubr.f32.gmra.mxu0 %v547
    %v705 = vpop.f32.mrf.mxu0
    %v706 = vadd.f32 0.0, %v705
    %v707 = vpop.f32.mrf.mxu0
    %708 = vmatprep.mubr.f32.mxu0 0.0
    %709 = vmatmul.mubr.f32.gmra.mxu0 %v620
    %v710 = vpop.f32.mrf.mxu0
    %v711 = vadd.f32 0.0, %v710
    %v712 = vpop.f32.mrf.mxu0
    %713 = vdwg.mxu0
    %v714 = vld [vmem:[#allocation8] sm:$0xff]
    %v715 = vld [vmem:[#allocation8 + $0x8] sm:$0xff]
    %v716 = vld [vmem:[#allocation8 + $0x10] sm:$0xff]
    %v717 = vld [vmem:[#allocation8 + $0x18] sm:$0xff]
    %v718 = vld [vmem:[#allocation8 + $0x20] sm:$0xff]
    %v719 = vld [vmem:[#allocation8 + $0x28] sm:$0xff]
    %v720 = vld [vmem:[#allocation8 + $0x30] sm:$0xff]
    %v721 = vld [vmem:[#allocation8 + $0x38] sm:$0xff]
    %v722 = vld [vmem:[#allocation8 + $0x40] sm:$0xff]
    %v723 = vld [vmem:[#allocation8 + $0x48] sm:$0xff]
    %v724 = vld [vmem:[#allocation8 + $0x50] sm:$0xff]
    %v725 = vld [vmem:[#allocation8 + $0x58] sm:$0xff]
    %v726 = vld [vmem:[#allocation8 + $0x60] sm:$0xff]
    %v727 = vld [vmem:[#allocation8 + $0x68] sm:$0xff]
    %v728 = vld [vmem:[#allocation8 + $0x70] sm:$0xff]
    %v729 = vld [vmem:[#allocation8 + $0x78] sm:$0xff]
    %v730 = vld [vmem:[#allocation10] sm:$0xff]
    %v731 = vld [vmem:[#allocation10 + $0x8] sm:$0xff]
    %v732 = vld [vmem:[#allocation10 + $0x10] sm:$0xff]
    %v733 = vld [vmem:[#allocation10 + $0x18] sm:$0xff]
    %v734 = vld [vmem:[#allocation10 + $0x20] sm:$0xff]
    %v735 = vld [vmem:[#allocation10 + $0x28] sm:$0xff]
    %v736 = vld [vmem:[#allocation10 + $0x30] sm:$0xff]
    %v737 = vld [vmem:[#allocation10 + $0x38] sm:$0xff]
    %v738 = vld [vmem:[#allocation10 + $0x40] sm:$0xff]
    %v739 = vld [vmem:[#allocation10 + $0x48] sm:$0xff]
    %v740 = vld [vmem:[#allocation10 + $0x50] sm:$0xff]
    %v741 = vld [vmem:[#allocation10 + $0x58] sm:$0xff]
    %v742 = vld [vmem:[#allocation10 + $0x60] sm:$0xff]
    %v743 = vld [vmem:[#allocation10 + $0x68] sm:$0xff]
    %v744 = vld [vmem:[#allocation10 + $0x70] sm:$0xff]
    %v745 = vld [vmem:[#allocation10 + $0x78] sm:$0xff]
    %746 = vmatprep.subr.mxu0 0.0
    %747 = vmatpush1.msra.mxu0 %v745
    %748 = vmatprep.subr.mxu0 0.0
    %749 = vmatpush1.msra.mxu0 %v744
    %750 = vmatprep.subr.mxu0 0.0
    %751 = vmatpush1.msra.mxu0 %v743
    %752 = vmatprep.subr.mxu0 0.0
    %753 = vmatpush1.msra.mxu0 %v742
    %754 = vmatprep.subr.mxu0 0.0
    %755 = vmatpush1.msra.mxu0 %v741
    %756 = vmatprep.subr.mxu0 0.0
    %757 = vmatpush1.msra.mxu0 %v740
    %758 = vmatprep.subr.mxu0 0.0
    %759 = vmatpush1.msra.mxu0 %v739
    %760 = vmatprep.subr.mxu0 0.0
    %761 = vmatpush1.msra.mxu0 %v738
    %762 = vmatprep.subr.mxu0 0.0
    %763 = vmatpush1.msra.mxu0 %v737
    %764 = vmatprep.subr.mxu0 0.0
    %765 = vmatpush1.msra.mxu0 %v736
    %766 = vmatprep.subr.mxu0 0.0
    %767 = vmatpush1.msra.mxu0 %v735
    %768 = vmatprep.subr.mxu0 0.0
    %769 = vmatpush1.msra.mxu0 %v734
    %770 = vmatprep.subr.mxu0 0.0
    %771 = vmatpush1.msra.mxu0 %v733
    %772 = vmatprep.subr.mxu0 0.0
    %773 = vmatpush1.msra.mxu0 %v732
    %774 = vmatprep.subr.mxu0 0.0
    %775 = vmatpush1.msra.mxu0 %v731
    %776 = vmatprep.subr.mxu0 0.0
    %777 = vmatpush1.msra.mxu0 %v730
    %778 = vmatprep.subr.mxu0 0.0
    %779 = vmatpush2.msra.mxu0 0.0
    %780 = vmatprep.subr.mxu0 0.0
    %781 = vmatpush2.msra.mxu0 0.0
    %782 = vmatprep.subr.mxu0 0.0
    %783 = vmatpush2.msra.mxu0 0.0
    %784 = vmatprep.subr.mxu0 0.0
    %785 = vmatpush2.msra.mxu0 0.0
    %786 = vmatprep.subr.mxu0 0.0
    %787 = vmatpush2.msra.mxu0 0.0
    %788 = vmatprep.subr.mxu0 0.0
    %789 = vmatpush2.msra.mxu0 0.0
    %790 = vmatprep.subr.mxu0 0.0
    %791 = vmatpush2.msra.mxu0 0.0
    %792 = vmatprep.subr.mxu0 0.0
    %793 = vmatpush2.msra.mxu0 0.0
    %794 = vmatprep.subr.mxu0 0.0
    %795 = vmatpush2.msra.mxu0 0.0
    %796 = vmatprep.subr.mxu0 0.0
    %797 = vmatpush2.msra.mxu0 0.0
    %798 = vmatprep.subr.mxu0 0.0
    %799 = vmatpush2.msra.mxu0 0.0
    %800 = vmatprep.subr.mxu0 0.0
    %801 = vmatpush2.msra.mxu0 0.0
    %802 = vmatprep.subr.mxu0 0.0
    %803 = vmatpush2.msra.mxu0 0.0
    %804 = vmatprep.subr.mxu0 0.0
    %805 = vmatpush2.msra.mxu0 0.0
    %806 = vmatprep.subr.mxu0 0.0
    %807 = vmatpush2.msra.mxu0 0.0
    %808 = vmatprep.subr.mxu0 0.0
    %809 = vmatpush2.msra.mxu0 0.0
    %810 = vmatprep.mubr.f32.mxu0 0.0
    %811 = vmatmul.mubr.f32.gmra.mxu0 %v706
    %v812 = vpop.f32.mrf.mxu0
    %v813 = vadd.f32 0.0, %v812
    %v814 = vpop.f32.mrf.mxu0
    %815 = vmatprep.mubr.f32.mxu0 0.0
    %816 = vmatmul.mubr.f32.gmra.mxu0 %v711
    %v817 = vpop.f32.mrf.mxu0
    %v818 = vadd.f32 0.0, %v817
    %v819 = vpop.f32.mrf.mxu0
    %820 = vdwg.mxu0
    %821 = vmatprep.subr.mxu0 0.0
    %822 = vmatpush1.msra.mxu0 %v729
    %823 = vmatprep.subr.mxu0 0.0
    %824 = vmatpush1.msra.mxu0 %v728
    %825 = vmatprep.subr.mxu0 0.0
    %826 = vmatpush1.msra.mxu0 %v727
    %827 = vmatprep.subr.mxu0 0.0
    %828 = vmatpush1.msra.mxu0 %v726
    %829 = vmatprep.subr.mxu0 0.0
    %830 = vmatpush1.msra.mxu0 %v725
    %831 = vmatprep.subr.mxu0 0.0
    %832 = vmatpush1.msra.mxu0 %v724
    %833 = vmatprep.subr.mxu0 0.0
    %834 = vmatpush1.msra.mxu0 %v723
    %835 = vmatprep.subr.mxu0 0.0
    %836 = vmatpush1.msra.mxu0 %v722
    %837 = vmatprep.subr.mxu0 0.0
    %838 = vmatpush1.msra.mxu0 %v721
    %839 = vmatprep.subr.mxu0 0.0
    %840 = vmatpush1.msra.mxu0 %v720
    %841 = vmatprep.subr.mxu0 0.0
    %842 = vmatpush1.msra.mxu0 %v719
    %843 = vmatprep.subr.mxu0 0.0
    %844 = vmatpush1.msra.mxu0 %v718
    %845 = vmatprep.subr.mxu0 0.0
    %846 = vmatpush1.msra.mxu0 %v717
    %847 = vmatprep.subr.mxu0 0.0
    %848 = vmatpush1.msra.mxu0 %v716
    %849 = vmatprep.subr.mxu0 0.0
    %850 = vmatpush1.msra.mxu0 %v715
    %851 = vmatprep.subr.mxu0 0.0
    %852 = vmatpush1.msra.mxu0 %v714
    %853 = vmatprep.subr.mxu0 0.0
    %854 = vmatpush2.msra.mxu0 0.0
    %855 = vmatprep.subr.mxu0 0.0
    %856 = vmatpush2.msra.mxu0 0.0
    %857 = vmatprep.subr.mxu0 0.0
    %858 = vmatpush2.msra.mxu0 0.0
    %859 = vmatprep.subr.mxu0 0.0
    %860 = vmatpush2.msra.mxu0 0.0
    %861 = vmatprep.subr.mxu0 0.0
    %862 = vmatpush2.msra.mxu0 0.0
    %863 = vmatprep.subr.mxu0 0.0
    %864 = vmatpush2.msra.mxu0 0.0
    %865 = vmatprep.subr.mxu0 0.0
    %866 = vmatpush2.msra.mxu0 0.0
    %867 = vmatprep.subr.mxu0 0.0
    %868 = vmatpush2.msra.mxu0 0.0
    %869 = vmatprep.subr.mxu0 0.0
    %870 = vmatpush2.msra.mxu0 0.0
    %871 = vmatprep.subr.mxu0 0.0
    %872 = vmatpush2.msra.mxu0 0.0
    %873 = vmatprep.subr.mxu0 0.0
    %874 = vmatpush2.msra.mxu0 0.0
    %875 = vmatprep.subr.mxu0 0.0
    %876 = vmatpush2.msra.mxu0 0.0
    %877 = vmatprep.subr.mxu0 0.0
    %878 = vmatpush2.msra.mxu0 0.0
    %879 = vmatprep.subr.mxu0 0.0
    %880 = vmatpush2.msra.mxu0 0.0
    %881 = vmatprep.subr.mxu0 0.0
    %882 = vmatpush2.msra.mxu0 0.0
    %883 = vmatprep.subr.mxu0 0.0
    %884 = vmatpush2.msra.mxu0 0.0
    %885 = vmatprep.mubr.f32.mxu0 0.0
    %886 = vmatmul.mubr.f32.gmra.mxu0 %v112
    %v887 = vpop.f32.mrf.mxu0
    %v888 = vadd.f32 %v813, %v887
    %v889 = vpop.f32.mrf.mxu0
    %890 = vmatprep.mubr.f32.mxu0 0.0
    %891 = vmatmul.mubr.f32.gmra.mxu0 %v113
    %v892 = vpop.f32.mrf.mxu0
    %v893 = vadd.f32 %v818, %v892
    %v894 = vpop.f32.mrf.mxu0
    %895 = vdwg.mxu0
    %v896 = vld [vmem:[%s5] sm:$0x1]
    %v898 = vlaneseq
    %v899 = vshrl.u32 %v898, 7
    %v900 = vsub.s32 0, %v899
    %v901 = vrot.slane %v896, %v900
    %v903 = vadd.f32 %v888, %v901
    %v904 = vadd.f32 %v893, %v901
    %v905 = vmax.f32 %v903, 0.0
    %v906 = vmax.f32 %v904, 0.0
    %v907 = vld [vmem:[#allocation11] sm:$0xff]
    %v908 = vld [vmem:[#allocation11 + $0x8] sm:$0xff]
    %v909 = vld [vmem:[#allocation11 + $0x10] sm:$0xff]
    %v910 = vld [vmem:[#allocation11 + $0x18] sm:$0xff]
    %v911 = vld [vmem:[#allocation11 + $0x20] sm:$0xff]
    %v912 = vld [vmem:[#allocation11 + $0x28] sm:$0xff]
    %v913 = vld [vmem:[#allocation11 + $0x30] sm:$0xff]
    %v914 = vld [vmem:[#allocation11 + $0x38] sm:$0xff]
    %v915 = vld [vmem:[#allocation11 + $0x40] sm:$0xff]
    %v916 = vld [vmem:[#allocation11 + $0x48] sm:$0xff]
    %v917 = vld [vmem:[#allocation11 + $0x50] sm:$0xff]
    %v918 = vld [vmem:[#allocation11 + $0x58] sm:$0xff]
    %v919 = vld [vmem:[#allocation11 + $0x60] sm:$0xff]
    %v920 = vld [vmem:[#allocation11 + $0x68] sm:$0xff]
    %v921 = vld [vmem:[#allocation11 + $0x70] sm:$0xff]
    %v922 = vld [vmem:[#allocation11 + $0x78] sm:$0xff]
    %v923 = vld [vmem:[%s7] sm:$0x1]
    %v925 = vlaneseq
    %v926 = vshrl.u32 %v925, 7
    %v927 = vsub.s32 0, %v926
    %v928 = vrot.slane %v923, %v927
    %930 = vmatprep.subr.mxu0 0.0
    %931 = vmatpush1.msra.mxu0 %v922
    %932 = vmatprep.subr.mxu0 0.0
    %933 = vmatpush1.msra.mxu0 %v921
    %934 = vmatprep.subr.mxu0 0.0
    %935 = vmatpush1.msra.mxu0 %v920
    %936 = vmatprep.subr.mxu0 0.0
    %937 = vmatpush1.msra.mxu0 %v919
    %938 = vmatprep.subr.mxu0 0.0
    %939 = vmatpush1.msra.mxu0 %v918
    %940 = vmatprep.subr.mxu0 0.0
    %941 = vmatpush1.msra.mxu0 %v917
    %942 = vmatprep.subr.mxu0 0.0
    %943 = vmatpush1.msra.mxu0 %v916
    %944 = vmatprep.subr.mxu0 0.0
    %945 = vmatpush1.msra.mxu0 %v915
    %946 = vmatprep.subr.mxu0 0.0
    %947 = vmatpush1.msra.mxu0 %v914
    %948 = vmatprep.subr.mxu0 0.0
    %949 = vmatpush1.msra.mxu0 %v913
    %950 = vmatprep.subr.mxu0 0.0
    %951 = vmatpush1.msra.mxu0 %v912
    %952 = vmatprep.subr.mxu0 0.0
    %953 = vmatpush1.msra.mxu0 %v911
    %954 = vmatprep.subr.mxu0 0.0
    %955 = vmatpush1.msra.mxu0 %v910
    %956 = vmatprep.subr.mxu0 0.0
    %957 = vmatpush1.msra.mxu0 %v909
    %958 = vmatprep.subr.mxu0 0.0
    %959 = vmatpush1.msra.mxu0 %v908
    %960 = vmatprep.subr.mxu0 0.0
    %961 = vmatpush1.msra.mxu0 %v907
    %962 = vmatprep.subr.mxu0 0.0
    %963 = vmatpush2.msra.mxu0 0.0
    %964 = vmatprep.subr.mxu0 0.0
    %965 = vmatpush2.msra.mxu0 0.0
    %966 = vmatprep.subr.mxu0 0.0
    %967 = vmatpush2.msra.mxu0 0.0
    %968 = vmatprep.subr.mxu0 0.0
    %969 = vmatpush2.msra.mxu0 0.0
    %970 = vmatprep.subr.mxu0 0.0
    %971 = vmatpush2.msra.mxu0 0.0
    %972 = vmatprep.subr.mxu0 0.0
    %973 = vmatpush2.msra.mxu0 0.0
    %974 = vmatprep.subr.mxu0 0.0
    %975 = vmatpush2.msra.mxu0 0.0
    %976 = vmatprep.subr.mxu0 0.0
    %977 = vmatpush2.msra.mxu0 0.0
    %978 = vmatprep.subr.mxu0 0.0
    %979 = vmatpush2.msra.mxu0 0.0
    %980 = vmatprep.subr.mxu0 0.0
    %981 = vmatpush2.msra.mxu0 0.0
    %982 = vmatprep.subr.mxu0 0.0
    %983 = vmatpush2.msra.mxu0 0.0
    %984 = vmatprep.subr.mxu0 0.0
    %985 = vmatpush2.msra.mxu0 0.0
    %986 = vmatprep.subr.mxu0 0.0
    %987 = vmatpush2.msra.mxu0 0.0
    %988 = vmatprep.subr.mxu0 0.0
    %989 = vmatpush2.msra.mxu0 0.0
    %990 = vmatprep.subr.mxu0 0.0
    %991 = vmatpush2.msra.mxu0 0.0
    %992 = vmatprep.subr.mxu0 0.0
    %993 = vmatpush2.msra.mxu0 0.0
    %994 = vmatprep.mubr.f32.mxu0 0.0
    %995 = vmatmul.mubr.f32.gmra.mxu0 %v905
    %v996 = vpop.f32.mrf.mxu0
    %v997 = vadd.f32 %v928, %v996
    %v998 = vpop.f32.mrf.mxu0
    %999 = vmatprep.mubr.f32.mxu0 0.0
    %1000 = vmatmul.mubr.f32.gmra.mxu0 %v906
    %v1001 = vpop.f32.mrf.mxu0
    %v1002 = vadd.f32 %v928, %v1001
    %v1003 = vpop.f32.mrf.mxu0
    %1004 = vdwg.mxu0
    %1005 = vst [vmem:[#allocation13] sm:$0xff] %v997
    %1006 = vst [vmem:[#allocation13 + $0x8] sm:$0xff] %v1002
    // Predicated region
    $region58: #{tpu_custom_call.1} parent=1 // pred_check
      _
    $region59: #{tpu_custom_call.1} parent=1 // pred_check_branch
      %1008 = sbr.rel (0) target = $region61
    $region60: #{tpu_custom_call.1} parent=1 // pred_region
      %s1010 = ssub.s32 256, 256
      %1011 = vsyncadd [#allocation4], %s1010
      %s1012 = sshll.u32 [#allocation13], 4
      %s1013 = int_to_ptr.vmem [resolvable:$true] %s1012
      %1018 = dma.vmem_to_hbm [thread:$0]  %s1013, 256, %s8, [#allocation4], 128, 128, 8
    $region61: #{tpu_custom_call.1} parent=1 // pred_fallthru
      _
    // Predicated region
    $region62: #{tpu_custom_call.1} parent=1 // pred_check
      _
    $region63: #{tpu_custom_call.1} parent=1 // pred_check_branch
      %1020 = sbr.rel (0) target = $region65
    $region64: #{tpu_custom_call.1} parent=1 // pred_region
      %1021 = dma.done [#allocation4], 256
    $region65: #{tpu_custom_call.1} parent=1 // pred_fallthru
      _
    %1022 = vsyncpa [#allocation3], 1
    %1023 = vsyncpa [#allocation6], 1
    %1024 = vsyncpa [#allocation9], 1
    %1025 = vsyncpa [#allocation12], 1
    %1026 = vsyncpa [#allocation4], 1

</llo_original>
